<compile_context>
chip_gen: v7x
topology: tpu7x:2x2x1
jax: 0.10.0
libtpu: 0.0.40
codegen_flags: <defaults>
</compile_context>

<pallas_src>
import functools
import math

import jax
import jax.numpy as jnp
from jax import lax
from jax.experimental import pallas as pl
from jax.experimental.pallas import tpu as pltpu


def _add_margin_kernel(xs_ref, wn_ref, lbl_ref, o_ref, *, sm, block_c):
    # xs_ref: (TB, D) pre-normalized rows, pre-scaled by s  (compute dtype)
    # wn_ref: (TC, D) pre-normalized class weights          (compute dtype)
    # lbl_ref: (TB, 1) int32 labels for these rows
    # MXU matmul with f32 accumulation; `s` is already folded into xs.
    logits = lax.dot_general(
        xs_ref[...], wn_ref[...],
        dimension_numbers=(((1,), (1,)), ((), ())),
        preferred_element_type=jnp.float32,
    )                                               # (TB, TC) f32 == s*cosine

    tb, tc = logits.shape
    # Shift the (TB,1) label by the class-tile offset instead of adding the
    # offset to the full (TB,TC) iota: one per-row sub instead of a tile add.
    lbl_local = lbl_ref[...] - pl.program_id(0) * block_c        # (TB, 1)
    col = lax.broadcasted_iota(jnp.int32, (tb, tc), 1)           # local columns
    margin = jnp.where(col == lbl_local, jnp.float32(sm), jnp.float32(0.0))
    o_ref[...] = (logits - margin).astype(o_ref.dtype)


def _round_up(v, n):
    return ((v + n - 1) // n) * n


def add_margin_product(x, weight, label, *, s=30.0, m=0.4,
                       block_b=256, block_c=1024,
                       compute_dtype=jnp.bfloat16,
                       out_dtype=jnp.float32):
    """x: (B, D), weight: (C, D), label: (B,) int -> (B, C) out_dtype logits."""
    B, D = x.shape
    C, D2 = weight.shape
    assert D == D2

    # ---- hoisted row normalization (once, outside the grid) ---------------
    # F.normalize(v, dim=1) = v / max(||v||, 1e-12); since sqrt is monotone,
    # max(||v||, eps) == sqrt(max(sum(v^2), eps^2)).  rsqrt + mul.
    eps2 = jnp.float32(1e-24)
    x32 = x.astype(jnp.float32)
    w32 = weight.astype(jnp.float32)
    x_inv = lax.rsqrt(jnp.maximum(jnp.sum(x32 * x32, axis=1, keepdims=True), eps2))
    w_inv = lax.rsqrt(jnp.maximum(jnp.sum(w32 * w32, axis=1, keepdims=True), eps2))
    # Fold s into the per-row x scale so the kernel epilogue has no s* multiply.
    xs = (x32 * (jnp.float32(s) * x_inv)).astype(compute_dtype)
    wn = (w32 * w_inv).astype(compute_dtype)

    # ---- tile selection + padding (robust to non-divisible B / C) ---------
    tb = min(block_b, _round_up(B, 8))       # sublane-aligned row tile
    tc = min(block_c, _round_up(C, 128))     # lane-dense class tile
    Bp = _round_up(B, tb)
    Cp = _round_up(C, tc)

    label_i32 = label.astype(jnp.int32)
    if Bp != B:
        xs = jnp.pad(xs, ((0, Bp - B), (0, 0)))
        label_i32 = jnp.pad(label_i32, (0, Bp - B))
    if Cp != C:
        wn = jnp.pad(wn, ((0, Cp - C), (0, 0)))
    label2d = label_i32.reshape(Bp, 1)

    # Classes on the outer grid axis, batch innermost: the W tile's block index
    # is constant across the inner axis, so Pallas keeps it resident in VMEM
    # (W read from HBM exactly once); only the small x/label stream repeats.
    grid = (Cp // tc, Bp // tb)

    kernel = functools.partial(
        _add_margin_kernel, sm=float(s) * float(m), block_c=tc)

    in_bytes = jnp.dtype(compute_dtype).itemsize
    out_bytes = jnp.dtype(out_dtype).itemsize
    cost = pl.CostEstimate(
        flops=2 * Bp * Cp * D,
        transcendentals=0,                                  # rsqrt hoisted out
        bytes_accessed=(Cp * D * in_bytes                   # W read once
                        + (Cp // tc) * Bp * D * in_bytes    # x re-read per class tile
                        + (Cp // tc) * Bp * 4               # labels
                        + Bp * Cp * out_bytes),             # output writeback
    )

    out = pl.pallas_call(
        kernel,
        out_shape=jax.ShapeDtypeStruct((Bp, Cp), out_dtype),
        grid=grid,
        in_specs=[
            pl.BlockSpec((tb, D), lambda i, j: (j, 0)),   # x rows (inner axis)
            pl.BlockSpec((tc, D), lambda i, j: (i, 0)),   # W classes (held over j)
            pl.BlockSpec((tb, 1), lambda i, j: (j, 0)),   # labels for these rows
        ],
        out_specs=pl.BlockSpec((tb, tc), lambda i, j: (j, i)),
        compiler_params=pltpu.CompilerParams(
            dimension_semantics=("parallel", "parallel"),
            vmem_limit_bytes=64 * 1024 * 1024,   # tiles above stay well under this
        ),
        cost_estimate=cost,
    )(xs, wn, label2d)

    if Bp != B or Cp != C:
        out = out[:B, :C]
    return out


def add_margin_product_ref(x, weight, label, *, s=30.0, m=0.4):
    """Pure-JAX reference mirroring the PyTorch forward."""
    eps = 1e-12
    xn = x / jnp.maximum(jnp.linalg.norm(x, axis=-1, keepdims=True), eps)
    wn = weight / jnp.maximum(jnp.linalg.norm(weight, axis=-1, keepdims=True), eps)
    cosine = xn @ wn.T
    phi = cosine - m
    one_hot = jax.nn.one_hot(label, weight.shape[0], dtype=cosine.dtype)
    return s * (one_hot * phi + (1.0 - one_hot) * cosine)


if __name__ == "__main__":
    S, M = 30.0, 0.4
    key = jax.random.PRNGKey(0)

    # --- test 1: nice shapes (batch=8, in_features=32, out_features=16) ----
    B, IN_F, OUT_F = 8, 32, 16
    kx, kw, kl, key = jax.random.split(key, 4)
    x = jax.random.normal(kx, (B, IN_F), dtype=jnp.float32)
    bound = math.sqrt(6.0 / (IN_F + OUT_F))   # nn.init.xavier_uniform_
    weight = jax.random.uniform(kw, (OUT_F, IN_F), minval=-bound, maxval=bound,
                                dtype=jnp.float32)
    label = jax.random.randint(kl, (B,), 0, OUT_F, dtype=jnp.int32)

    ref = add_margin_product_ref(x, weight, label, s=S, m=M)

    out_f32 = add_margin_product(x, weight, label, s=S, m=M,
                                 compute_dtype=jnp.float32)
    out_f32 = jax.block_until_ready(out_f32)
    assert out_f32.shape == (B, OUT_F)
    assert jnp.allclose(out_f32, ref, atol=1e-4, rtol=1e-3), "f32 mismatch vs reference"

    out_bf16 = add_margin_product(x, weight, label, s=S, m=M,
                                  compute_dtype=jnp.bfloat16)
    out_bf16 = jax.block_until_ready(out_bf16)
    assert float(jnp.max(jnp.abs(out_bf16 - ref))) < 0.5, "bf16 path mismatch vs reference"

    # --- test 2: awkward shapes (exercise the padding path) ----------------
    B2, IN_F2, OUT_F2 = 6, 40, 19
    kx2, kw2, kl2, key = jax.random.split(key, 4)
    x2 = jax.random.normal(kx2, (B2, IN_F2), dtype=jnp.float32)
    bound2 = math.sqrt(6.0 / (IN_F2 + OUT_F2))
    weight2 = jax.random.uniform(kw2, (OUT_F2, IN_F2), minval=-bound2,
                                 maxval=bound2, dtype=jnp.float32)
    label2 = jax.random.randint(kl2, (B2,), 0, OUT_F2, dtype=jnp.int32)

    ref2 = add_margin_product_ref(x2, weight2, label2, s=S, m=M)
    out2 = add_margin_product(x2, weight2, label2, s=S, m=M,
                              compute_dtype=jnp.float32)
    out2 = jax.block_until_ready(out2)
    assert out2.shape == (B2, OUT_F2)
    assert jnp.allclose(out2, ref2, atol=1e-4, rtol=1e-3), "padded-shape mismatch vs reference"

    print("KERNEL_OK")
</pallas_src>

<mosaic_0001>
module attributes {stable_mosaic.version = 11 : i64} {
  func.func @_add_margin_kernel(%arg0: i32, %arg1: i32, %arg2: memref<8x32xf32, #tpu.memory_space<vmem>>, %arg3: memref<128x32xf32, #tpu.memory_space<vmem>>, %arg4: memref<8x1xi32, #tpu.memory_space<vmem>>, %arg5: memref<8x128xf32, #tpu.memory_space<vmem>>) attributes {dimension_semantics = [#tpu.dimension_semantics<parallel>, #tpu.dimension_semantics<parallel>], iteration_bounds = array<i64: 1, 1>, scalar_prefetch = 0 : i64, scratch_operands = 0 : i64, tpu.core_type = #tpu.core_type<tc>, window_params = [{transform_indices = @transform_0, window_bounds = array<i64: 8, 32>}, {transform_indices = @transform_1, window_bounds = array<i64: 128, 32>}, {transform_indices = @transform_2, window_bounds = array<i64: 8, 1>}, {transform_indices = @transform_3, window_bounds = array<i64: 8, 128>}]} {
    %c0 = arith.constant 0 : index
    %c0_0 = arith.constant 0 : index
    %0 = vector.load %arg2[%c0, %c0_0] : memref<8x32xf32, #tpu.memory_space<vmem>>, vector<8x32xf32>
    %c0_1 = arith.constant 0 : index
    %c0_2 = arith.constant 0 : index
    %1 = vector.load %arg3[%c0_1, %c0_2] : memref<128x32xf32, #tpu.memory_space<vmem>>, vector<128x32xf32>
    %cst = arith.constant dense<0.000000e+00> : vector<8x128xf32>
    %2 = tpu.matmul %0, %1, %cst {dimension_numbers = #tpu.dot_dimension_numbers<[1], [1], [0], [0], [0, 0, 1, 0], [], []>} : vector<8x32xf32>, vector<128x32xf32>, vector<8x128xf32> -> vector<8x128xf32>
    %c0_3 = arith.constant 0 : index
    %c0_4 = arith.constant 0 : index
    %3 = vector.load %arg4[%c0_3, %c0_4] : memref<8x1xi32, #tpu.memory_space<vmem>>, vector<8x1xi32>
    %c128_i32 = arith.constant 128 : i32
    %4 = arith.muli %arg0, %c128_i32 : i32
    %5 = vector.broadcast %4 : i32 to vector<8x1xi32>
    %6 = arith.subi %3, %5 : vector<8x1xi32>
    %7 = tpu.iota {dimensions = array<i32: 1>} : vector<8x128xi32>
    %8 = vector.broadcast %6 : vector<8x1xi32> to vector<8x128xi32>
    %9 = arith.cmpi eq, %7, %8 : vector<8x128xi32>
    %cst_5 = arith.constant 1.200000e+01 : f32
    %cst_6 = arith.constant 0.000000e+00 : f32
    %10 = vector.broadcast %cst_5 : f32 to vector<8x128xf32>
    %11 = vector.broadcast %cst_6 : f32 to vector<8x128xf32>
    %12 = arith.select %9, %10, %11 : vector<8x128xi1>, vector<8x128xf32>
    %13 = arith.subf %2, %12 : vector<8x128xf32>
    %c0_7 = arith.constant 0 : index
    %c0_8 = arith.constant 0 : index
    %14 = vector.load %arg5[%c0_7, %c0_8] : memref<8x128xf32, #tpu.memory_space<vmem>>, vector<8x128xf32>
    tpu.vector_store %arg5[%c0_7, %c0_8], %13 {strides = array<i32>} : memref<8x128xf32, #tpu.memory_space<vmem>>, vector<8x128xf32>,
    return
  }
  func.func @transform_0(%arg0: i32, %arg1: i32) -> (i32, i32) {
    %c0_i32 = arith.constant 0 : i32
    %c0_i32_0 = arith.constant 0 : i32
    return %arg1, %c0_i32 : i32, i32
  }
  func.func @transform_1(%arg0: i32, %arg1: i32) -> (i32, i32) {
    %c0_i32 = arith.constant 0 : i32
    %c0_i32_0 = arith.constant 0 : i32
    return %arg0, %c0_i32 : i32, i32
  }
  func.func @transform_2(%arg0: i32, %arg1: i32) -> (i32, i32) {
    %c0_i32 = arith.constant 0 : i32
    %c0_i32_0 = arith.constant 0 : i32
    return %arg1, %c0_i32 : i32, i32
  }
  func.func @transform_3(%arg0: i32, %arg1: i32) -> (i32, i32) {
    %c0_i32 = arith.constant 0 : i32
    return %arg1, %arg0 : i32, i32
  }
}

</mosaic_0001>

<llo_original>
// kernel: tpu_custom_call.1
$region0: #{tpu_custom_call.1}
  #allocation0 [shape = 'u32[]', space=smem, size = 0x4, offset = 0x4, fixed_abs, tag = 'smem constant byte address 0x4 - core index']
  #allocation1 [shape = 'u32[144,128]{1,0:T(1,128)}', space=vmem, size = 0x12000, scoped, tag = 'internal scratch']
  %s0 = inlined_call_operand.hbm [shape: f32[8,32], index: 0, kind: input, shape index: {}]
  %s1 = inlined_call_operand.hbm [shape: f32[128,32], index: 1, kind: input, shape index: {}]
  %s2 = inlined_call_operand.hbm [shape: s32[8,1], index: 2, kind: input, shape index: {}]
  %s3 = inlined_call_operand.hbm [shape: f32[8,128], index: 3, kind: output, shape index: {}]
  %s4 = sld [smem:[#allocation0]]
  $region34: #{tpu_custom_call.1} parent=0
    _
  %s6 = ssub.s32 1, %s4
  %s7 = scalar_select 0, %s6, %s4
  $region1: #{tpu_custom_call.1} parent=0
    #allocation2 [shape = 'u8[4096]{0}', space=vmem, size = 0x1000, scoped, tag = 'input window, operand 0, single buffered']
    #allocation3 [shape = 's32[1]{0}', space=sflag, size = 0x4, scoped, tag = 'scoped memory for tpu_custom_call.1']
    #allocation4 [shape = 's32[1]{0}', space=sflag, size = 0x4, scoped, tag = 'scoped memory for tpu_custom_call.1']
    #allocation5 [shape = 'u8[65536]{0}', space=vmem, size = 0x10000, scoped, tag = 'input window, operand 1, single buffered']
    #allocation6 [shape = 's32[1]{0}', space=sflag, size = 0x4, scoped, tag = 'scoped memory for tpu_custom_call.1']
    #allocation7 [shape = 'u8[4096]{0}', space=vmem, size = 0x1000, scoped, tag = 'input window, operand 2, single buffered']
    #allocation8 [shape = 'u8[4096]{0}', space=vmem, size = 0x1000, scoped, tag = 'output window, operand 0, single buffered']
    %8 = vsyncpa [#allocation3], 0
    %9 = vsyncpa [#allocation6], 0
    %10 = vsyncpa [#allocation4], 0
    // Predicated region
    $region2: #{tpu_custom_call.1} parent=1 // pred_check
      _
    $region3: #{tpu_custom_call.1} parent=1 // pred_check_branch
      %12 = sbr.rel (0) target = $region5
    $region4: #{tpu_custom_call.1} parent=1 // pred_region
      %s14 = ssub.s32 128, 128
      %15 = vsyncadd [#allocation3], %s14
      %s17 = sshll.u32 [#allocation2], 4
      %s18 = int_to_ptr.vmem [resolvable:$true] %s17
      %20 = dma.hbm_to_vmem [thread:$0]  %s0, 128, %s18, [#allocation3]
    $region5: #{tpu_custom_call.1} parent=1 // pred_fallthru
      _
    // Predicated region
    $region6: #{tpu_custom_call.1} parent=1 // pred_check
      _
    $region7: #{tpu_custom_call.1} parent=1 // pred_check_branch
      %22 = sbr.rel (0) target = $region9
    $region8: #{tpu_custom_call.1} parent=1 // pred_region
      %s24 = ssub.s32 2048, 2048
      %25 = vsyncadd [#allocation6], %s24
      %s26 = sshll.u32 [#allocation5], 4
      %s27 = int_to_ptr.vmem [resolvable:$true] %s26
      %32 = dma.hbm_to_vmem [thread:$0]  %s1, 2048, %s27, [#allocation6], 128, 128, 8
    $region9: #{tpu_custom_call.1} parent=1 // pred_fallthru
      _
    // Predicated region
    $region10: #{tpu_custom_call.1} parent=1 // pred_check
      _
    $region11: #{tpu_custom_call.1} parent=1 // pred_check_branch
      %34 = sbr.rel (0) target = $region13
    $region12: #{tpu_custom_call.1} parent=1 // pred_region
      %s36 = ssub.s32 128, 128
      %37 = vsyncadd [#allocation6], %s36
      %s39 = sshll.u32 [#allocation7], 4
      %s40 = int_to_ptr.vmem [resolvable:$true] %s39
      %42 = dma.hbm_to_vmem [thread:$0]  %s2, 128, %s40, [#allocation6]
    $region13: #{tpu_custom_call.1} parent=1 // pred_fallthru
      _
    // Predicated region
    $region14: #{tpu_custom_call.1} parent=1 // pred_check
      _
    $region15: #{tpu_custom_call.1} parent=1 // pred_check_branch
      %44 = sbr.rel (0) target = $region17
    $region16: #{tpu_custom_call.1} parent=1 // pred_region
      %45 = dma.done [#allocation3], 128
    $region17: #{tpu_custom_call.1} parent=1 // pred_fallthru
      _
    // Predicated region
    $region18: #{tpu_custom_call.1} parent=1 // pred_check
      _
    $region19: #{tpu_custom_call.1} parent=1 // pred_check_branch
      %47 = sbr.rel (0) target = $region21
    $region20: #{tpu_custom_call.1} parent=1 // pred_region
      %48 = dma.done [#allocation6], 2048
    $region21: #{tpu_custom_call.1} parent=1 // pred_fallthru
      _
    // Predicated region
    $region22: #{tpu_custom_call.1} parent=1 // pred_check
      _
    $region23: #{tpu_custom_call.1} parent=1 // pred_check_branch
      %50 = sbr.rel (0) target = $region25
    $region24: #{tpu_custom_call.1} parent=1 // pred_region
      %51 = dma.done [#allocation6], 128
    $region25: #{tpu_custom_call.1} parent=1 // pred_fallthru
      _
    %v52 = vld [vmem:[#allocation2] sm:$0xff]
    %v53 = vld [vmem:[#allocation5] sm:$0xff]
    %v54 = vld [vmem:[#allocation5 + $0x8] sm:$0xff]
    %v55 = vld [vmem:[#allocation5 + $0x10] sm:$0xff]
    %v56 = vld [vmem:[#allocation5 + $0x18] sm:$0xff]
    %v57 = vld [vmem:[#allocation5 + $0x20] sm:$0xff]
    %v58 = vld [vmem:[#allocation5 + $0x28] sm:$0xff]
    %v59 = vld [vmem:[#allocation5 + $0x30] sm:$0xff]
    %v60 = vld [vmem:[#allocation5 + $0x38] sm:$0xff]
    %v61 = vld [vmem:[#allocation5 + $0x40] sm:$0xff]
    %v62 = vld [vmem:[#allocation5 + $0x48] sm:$0xff]
    %v63 = vld [vmem:[#allocation5 + $0x50] sm:$0xff]
    %v64 = vld [vmem:[#allocation5 + $0x58] sm:$0xff]
    %v65 = vld [vmem:[#allocation5 + $0x60] sm:$0xff]
    %v66 = vld [vmem:[#allocation5 + $0x68] sm:$0xff]
    %v67 = vld [vmem:[#allocation5 + $0x70] sm:$0xff]
    %v68 = vld [vmem:[#allocation5 + $0x78] sm:$0xff]
    %vm69 = vcmask 261120
    %v71 = vsel %vm69, %v52, 0
    %v74 = vsel %vm69, %v53, 0
    %v77 = vsel %vm69, %v54, 0
    %v80 = vsel %vm69, %v55, 0
    %v83 = vsel %vm69, %v56, 0
    %v86 = vsel %vm69, %v57, 0
    %v89 = vsel %vm69, %v58, 0
    %v92 = vsel %vm69, %v59, 0
    %v95 = vsel %vm69, %v60, 0
    %v98 = vsel %vm69, %v61, 0
    %v101 = vsel %vm69, %v62, 0
    %v104 = vsel %vm69, %v63, 0
    %v107 = vsel %vm69, %v64, 0
    %v110 = vsel %vm69, %v65, 0
    %v113 = vsel %vm69, %v66, 0
    %v116 = vsel %vm69, %v67, 0
    %v119 = vsel %vm69, %v68, 0
    %121 = vmatprep.subr.mxu0 0.0
    %122 = vmatpush1.xpose.msra.mxu0 %v74
    %123 = vmatprep.subr.mxu0 0.0
    %124 = vmatpush1.xpose.msra.mxu0 %v77
    %125 = vmatprep.subr.mxu0 0.0
    %126 = vmatpush1.xpose.msra.mxu0 %v80
    %127 = vmatprep.subr.mxu0 0.0
    %128 = vmatpush1.xpose.msra.mxu0 %v83
    %129 = vmatprep.subr.mxu0 0.0
    %130 = vmatpush1.xpose.msra.mxu0 %v86
    %131 = vmatprep.subr.mxu0 0.0
    %132 = vmatpush1.xpose.msra.mxu0 %v89
    %133 = vmatprep.subr.mxu0 0.0
    %134 = vmatpush1.xpose.msra.mxu0 %v92
    %135 = vmatprep.subr.mxu0 0.0
    %136 = vmatpush1.xpose.msra.mxu0 %v95
    %137 = vmatprep.subr.mxu0 0.0
    %138 = vmatpush1.xpose.msra.mxu0 %v98
    %139 = vmatprep.subr.mxu0 0.0
    %140 = vmatpush1.xpose.msra.mxu0 %v101
    %141 = vmatprep.subr.mxu0 0.0
    %142 = vmatpush1.xpose.msra.mxu0 %v104
    %143 = vmatprep.subr.mxu0 0.0
    %144 = vmatpush1.xpose.msra.mxu0 %v107
    %145 = vmatprep.subr.mxu0 0.0
    %146 = vmatpush1.xpose.msra.mxu0 %v110
    %147 = vmatprep.subr.mxu0 0.0
    %148 = vmatpush1.xpose.msra.mxu0 %v113
    %149 = vmatprep.subr.mxu0 0.0
    %150 = vmatpush1.xpose.msra.mxu0 %v116
    %151 = vmatprep.subr.mxu0 0.0
    %152 = vmatpush1.xpose.msra.mxu0 %v119
    %153 = vmatprep.subr.mxu0 0.0
    %154 = vmatpush1.xpose.msra.mxu0 0.0
    %155 = vmatprep.subr.mxu0 0.0
    %156 = vmatpush1.xpose.msra.mxu0 0.0
    %157 = vmatprep.subr.mxu0 0.0
    %158 = vmatpush1.xpose.msra.mxu0 0.0
    %159 = vmatprep.subr.mxu0 0.0
    %160 = vmatpush1.xpose.msra.mxu0 0.0
    %161 = vmatprep.subr.mxu0 0.0
    %162 = vmatpush1.xpose.msra.mxu0 0.0
    %163 = vmatprep.subr.mxu0 0.0
    %164 = vmatpush1.xpose.msra.mxu0 0.0
    %165 = vmatprep.subr.mxu0 0.0
    %166 = vmatpush1.xpose.msra.mxu0 0.0
    %167 = vmatprep.subr.mxu0 0.0
    %168 = vmatpush1.xpose.msra.mxu0 0.0
    %169 = vmatprep.subr.mxu0 0.0
    %170 = vmatpush1.xpose.msra.mxu0 0.0
    %171 = vmatprep.subr.mxu0 0.0
    %172 = vmatpush1.xpose.msra.mxu0 0.0
    %173 = vmatprep.subr.mxu0 0.0
    %174 = vmatpush1.xpose.msra.mxu0 0.0
    %175 = vmatprep.subr.mxu0 0.0
    %176 = vmatpush1.xpose.msra.mxu0 0.0
    %177 = vmatprep.subr.mxu0 0.0
    %178 = vmatpush1.xpose.msra.mxu0 0.0
    %179 = vmatprep.subr.mxu0 0.0
    %180 = vmatpush1.xpose.msra.mxu0 0.0
    %181 = vmatprep.subr.mxu0 0.0
    %182 = vmatpush1.xpose.msra.mxu0 0.0
    %183 = vmatprep.subr.mxu0 0.0
    %184 = vmatpush1.xpose.msra.mxu0 0.0
    %185 = vmatprep.mubr.f32.mxu0 0.0
    %186 = vmatmul.mubr.f32.gmra.mrb[0].mxu0 %v71
    %v187 = vpop.f32.mrb[0].mxu0
    %v188 = vadd.f32 0.0, %v187
    %v189 = vpop.f32.mrb[0].mxu0
    %190 = vdwg.mxu0
    %v191 = vld [vmem:[#allocation7] sm:$0xff]
    %s192 = smul.u32 0, 128
    %v193 = vstv %s192
    %v194 = vsub.s32 %v191, %v193
    %v195 = vlaneseq
    %v196 = vand.u32 %v195, 127
    %197 = vset.pattern.permute.xlu0 0
    %198 = vperm.xlu0 %197, %v194
    %v199 = vpop.permute.xlu0 %198
    %vm200 = vcmp.eq.s32.totalorder %v196, %v199
    %v201 = vsel %vm200, 12.0, 0.0
    %v202 = vsub.f32 %v188, %v201
    %203 = vst [vmem:[#allocation8] sm:$0xff] %v202
    // Predicated region
    $region26: #{tpu_custom_call.1} parent=1 // pred_check
      _
    $region27: #{tpu_custom_call.1} parent=1 // pred_check_branch
      %205 = sbr.rel (0) target = $region29
    $region28: #{tpu_custom_call.1} parent=1 // pred_region
      %s207 = ssub.s32 128, 128
      %208 = vsyncadd [#allocation4], %s207
      %s210 = sshll.u32 [#allocation8], 4
      %s211 = int_to_ptr.vmem [resolvable:$true] %s210
      %213 = dma.vmem_to_hbm [thread:$0]  %s211, 128, %s3, [#allocation4]
    $region29: #{tpu_custom_call.1} parent=1 // pred_fallthru
      _
    // Predicated region
    $region30: #{tpu_custom_call.1} parent=1 // pred_check
      _
    $region31: #{tpu_custom_call.1} parent=1 // pred_check_branch
      %215 = sbr.rel (0) target = $region33
    $region32: #{tpu_custom_call.1} parent=1 // pred_region
      %216 = dma.done [#allocation4], 128
    $region33: #{tpu_custom_call.1} parent=1 // pred_fallthru
      _
    %217 = vsyncpa [#allocation3], 1
    %218 = vsyncpa [#allocation6], 1
    %219 = vsyncpa [#allocation4], 1

</llo_original>
